<compile_context>
chip_gen: v5e
topology: v5e:2x2
jax: 0.10.0
libtpu: 0.0.40
codegen_flags: <defaults>
</compile_context>

<pallas_src>
import math
import functools

import jax
import jax.numpy as jnp
from jax.experimental import pallas as pl
from jax.experimental.pallas import tpu as pltpu

LN_EPS = 1e-5                    # torch.nn.LayerNorm default eps


# ------------------------------- helpers ------------------------------------

def _round_up(x, m):
    return ((x + m - 1) // m) * m


def _tpu_budget():
    """Generation-aware scoped-VMEM budget and row tile.
    v5e/v6e (128 MiB): ~108 MiB limit, 512-row tiles.  v7x (64 MiB): ~54 MiB, 256."""
    try:
        cap = int(pltpu.get_tpu_info().vmem_capacity_bytes)
    except Exception:
        cap = None
    if cap is None:
        return 48 * 1024 * 1024, 256          # safe fallback on any generation
    limit = int(cap * 0.85)                   # ~15% headroom for Mosaic scratch
    row_tile = 512 if cap >= 100 * 1024 * 1024 else 256
    return limit, row_tile


VMEM_LIMIT, ROW_TILE = _tpu_budget()


def _row_tile(M):
    # Biggest MXU-aligned row tile not exceeding the (8-padded) row count.
    return min(ROW_TILE, _round_up(M, 8))


def _k_tile(Fh):
    # Lane-aligned tile over the FFN hidden dimension (full Fh if not 128-aligned).
    for t in (512, 256, 128):
        if Fh % t == 0:
            return t
    return Fh


def _cp(sems):
    return pltpu.CompilerParams(dimension_semantics=sems,
                                vmem_limit_bytes=VMEM_LIMIT)


def _probe_single_buffered():
    """Feature-detect pipeline_mode=pl.Buffered(1) for grid-invariant weights."""
    if not hasattr(pl, "Buffered"):
        return None
    try:
        def k(x_ref, w_ref, o_ref):
            o_ref[...] = x_ref[...] + w_ref[...]
        x = jnp.zeros((8, 128), jnp.float32)
        out = pl.pallas_call(
            k,
            out_shape=jax.ShapeDtypeStruct((8, 128), jnp.float32),
            grid=(2,),
            in_specs=[pl.BlockSpec((8, 128), lambda i: (0, 0)),
                      pl.BlockSpec((8, 128), lambda i: (0, 0),
                                   pipeline_mode=pl.Buffered(1))],
            out_specs=pl.BlockSpec((8, 128), lambda i: (0, 0)),
        )(x, x)
        jax.block_until_ready(out)
        return pl.Buffered(1)
    except Exception:
        return None


_WEIGHT_MODE = _probe_single_buffered()


def _wspec(block_shape, index_map):
    """BlockSpec for grid-invariant weights/biases (single-buffered when supported)."""
    if _WEIGHT_MODE is not None:
        return pl.BlockSpec(block_shape, index_map, pipeline_mode=_WEIGHT_MODE)
    return pl.BlockSpec(block_shape, index_map)


def _layernorm(z, g, b):
    mu = jnp.mean(z, axis=-1, keepdims=True)
    var = jnp.mean((z - mu) ** 2, axis=-1, keepdims=True)
    return (z - mu) * jax.lax.rsqrt(var + LN_EPS) * g + b


def _gelu(x):
    # TODO(synk): models.gelu assumed tanh-approximation GELU; if the reference
    # uses exact erf GELU, replace with 0.5*x*(1+erf(x/sqrt(2))).
    c = math.sqrt(2.0 / math.pi)
    return 0.5 * x * (1.0 + jnp.tanh(c * (x + 0.044715 * x * x * x)))


# ----------------------------- Pallas kernels -------------------------------

def _emb_ln_fit_kernel(x_ref, g_ref, b_ref, fw_ref, fb_ref, o_ref, fo_ref):
    # LayerNorm(embeddings) + fit_dense epilogue (no zero-residual input).
    y = _layernorm(x_ref[...], g_ref[...], b_ref[...])
    o_ref[...] = y.astype(o_ref.dtype)
    fo_ref[...] = (jnp.dot(y.astype(jnp.bfloat16), fw_ref[...],
                           preferred_element_type=jnp.float32)
                   + fb_ref[...]).astype(fo_ref.dtype)


def emb_ln_fit(x, gamma, beta, fit_w, fit_b):
    M, H = x.shape
    F = fit_w.shape[1]
    tm = _row_tile(M)
    nt = pl.cdiv(M, tm)
    # TODO(synk): for production fit_size < 128, pad fit_w to a 128 multiple so
    # fit outputs are lane-dense (avoids masked vst partial stores).
    ln_out, fit_out = pl.pallas_call(
        _emb_ln_fit_kernel,
        out_shape=(jax.ShapeDtypeStruct((M, H), jnp.float32),
                   jax.ShapeDtypeStruct((M, F), jnp.float32)),
        grid=(nt,),
        in_specs=[pl.BlockSpec((tm, H), lambda i: (i, 0)),
                  _wspec((1, H), lambda i: (0, 0)),
                  _wspec((1, H), lambda i: (0, 0)),
                  _wspec((H, F), lambda i: (0, 0)),
                  _wspec((1, F), lambda i: (0, 0))],
        out_specs=(pl.BlockSpec((tm, H), lambda i: (i, 0)),
                   pl.BlockSpec((tm, F), lambda i: (i, 0))),
        compiler_params=_cp(("parallel",)),
    )(x, gamma.reshape(1, H), beta.reshape(1, H), fit_w, fit_b.reshape(1, F))
    return ln_out, fit_out


def _attn_kernel(num_heads, head_dim, scale, x_ref, m_ref, w_ref, b_ref,
                 s_ref, o_ref):
    # One batch element per program.  QKV projection is fused here: per-head
    # weight slabs (3, heads, H, D) live in VMEM, qkv never touches HBM.  Each
    # head's context is written directly into its [*, h*D:(h+1)*D] lane window
    # (no concatenate, no head transposes in plain JAX).
    x = x_ref[0].astype(jnp.bfloat16)          # (S, H)
    mask = m_ref[0]                            # (1, S) additive mask over keys
    for h in range(num_heads):                 # static unrolled loop over heads
        q = (jnp.dot(x, w_ref[0, h], preferred_element_type=jnp.float32)
             + b_ref[0, h])
        k = (jnp.dot(x, w_ref[1, h], preferred_element_type=jnp.float32)
             + b_ref[1, h])
        v = (jnp.dot(x, w_ref[2, h], preferred_element_type=jnp.float32)
             + b_ref[2, h])
        s = jax.lax.dot_general(q.astype(jnp.bfloat16), k.astype(jnp.bfloat16),
                                (((1,), (1,)), ((), ())),
                                preferred_element_type=jnp.float32) * scale
        s = s + mask
        # raw (masked) attention logits returned, bf16 to halve HBM writeback
        s_ref[0, h] = s.astype(s_ref.dtype)
        e = jnp.exp(s - jnp.max(s, axis=-1, keepdims=True))
        p = e * pl.reciprocal(jnp.sum(e, axis=-1, keepdims=True), approx=True)
        ctx = jnp.dot(p.astype(jnp.bfloat16), v.astype(jnp.bfloat16),
                      preferred_element_type=jnp.float32)
        o_ref[0, :, h * head_dim:(h + 1) * head_dim] = ctx.astype(o_ref.dtype)


def attention_core(x, add_mask, wqkv, bqkv, num_heads):
    """x:[B,S,H] f32; add_mask:[B,1,S]; wqkv:[3,heads,H,D] bf16; bqkv:[3,heads,1,D].
    Returns (scores[B,heads,S,S] bf16, ctx[B,S,H] bf16)."""
    B, S, H = x.shape
    D = H // num_heads
    scale = 1.0 / math.sqrt(D)
    # TODO(synk): for long sequences add a query-tile grid axis (online softmax)
    # so the SxS score tile does not have to fit VMEM; S is small here.
    kern = functools.partial(_attn_kernel, num_heads, D, scale)
    scores, ctx = pl.pallas_call(
        kern,
        out_shape=(jax.ShapeDtypeStruct((B, num_heads, S, S), jnp.bfloat16),
                   jax.ShapeDtypeStruct((B, S, H), jnp.bfloat16)),
        grid=(B,),
        in_specs=[pl.BlockSpec((1, S, H), lambda b: (b, 0, 0)),
                  pl.BlockSpec((1, 1, S), lambda b: (b, 0, 0)),
                  _wspec((3, num_heads, H, D), lambda b: (0, 0, 0, 0)),
                  _wspec((3, num_heads, 1, D), lambda b: (0, 0, 0, 0))],
        out_specs=(pl.BlockSpec((1, num_heads, S, S), lambda b: (b, 0, 0, 0)),
                   pl.BlockSpec((1, S, H), lambda b: (b, 0, 0))),
        compiler_params=_cp(("parallel",)),
    )(x, add_mask, wqkv, bqkv)
    return scores, ctx


def _proj_ln_fit_kernel(c_ref, r_ref, wo_ref, bo_ref, g_ref, b_ref,
                        fw_ref, fb_ref, o_ref, fo_ref):
    # attention output projection + residual + LayerNorm + fit_dense_attn.
    proj = (jnp.dot(c_ref[...].astype(jnp.bfloat16), wo_ref[...],
                    preferred_element_type=jnp.float32) + bo_ref[...])
    y = _layernorm(proj + r_ref[...].astype(jnp.float32), g_ref[...], b_ref[...])
    o_ref[...] = y.astype(o_ref.dtype)
    fo_ref[...] = (jnp.dot(y.astype(jnp.bfloat16), fw_ref[...],
                           preferred_element_type=jnp.float32)
                   + fb_ref[...]).astype(fo_ref.dtype)


def proj_ln_fit(ctx, resid, wo, bo, gamma, beta, fit_w, fit_b):
    M, H = ctx.shape
    F = fit_w.shape[1]
    tm = _row_tile(M)
    nt = pl.cdiv(M, tm)
    out, fit = pl.pallas_call(
        _proj_ln_fit_kernel,
        out_shape=(jax.ShapeDtypeStruct((M, H), jnp.bfloat16),     # bf16 carry
                   jax.ShapeDtypeStruct((M, F), jnp.float32)),
        grid=(nt,),
        in_specs=[pl.BlockSpec((tm, H), lambda i: (i, 0)),
                  pl.BlockSpec((tm, H), lambda i: (i, 0)),
                  _wspec((H, H), lambda i: (0, 0)),
                  _wspec((1, H), lambda i: (0, 0)),
                  _wspec((1, H), lambda i: (0, 0)),
                  _wspec((1, H), lambda i: (0, 0)),
                  _wspec((H, F), lambda i: (0, 0)),
                  _wspec((1, F), lambda i: (0, 0))],
        out_specs=(pl.BlockSpec((tm, H), lambda i: (i, 0)),
                   pl.BlockSpec((tm, F), lambda i: (i, 0))),
        compiler_params=_cp(("parallel",)),
    )(ctx, resid, wo, bo.reshape(1, H), gamma.reshape(1, H), beta.reshape(1, H),
      fit_w, fit_b.reshape(1, F))
    return out, fit


def _ffn_fit_kernel(x_ref, w1_ref, b1_ref, w2_ref, b2_ref, g_ref, bt_ref,
                    fw_ref, fb_ref, o_ref, fo_ref, acc_ref):
    # dense1 -> gelu -> dense2 (K-tiled over Fh with f32 accumulator)
    # -> residual -> LayerNorm -> fit_dense (dropout = eval identity).
    k = pl.program_id(1)

    @pl.when(k == 0)
    def _():
        acc_ref[...] = jnp.zeros_like(acc_ref)

    x = x_ref[...]
    h = (jnp.dot(x.astype(jnp.bfloat16), w1_ref[...],
                 preferred_element_type=jnp.float32) + b1_ref[...])
    h = _gelu(h)
    acc_ref[...] += jnp.dot(h.astype(jnp.bfloat16), w2_ref[...],
                            preferred_element_type=jnp.float32)

    @pl.when(k == pl.num_programs(1) - 1)
    def _():
        y = acc_ref[...] + b2_ref[...]
        z = _layernorm(x.astype(jnp.float32) + y, g_ref[...], bt_ref[...])
        o_ref[...] = z.astype(o_ref.dtype)
        fo_ref[...] = (jnp.dot(z.astype(jnp.bfloat16), fw_ref[...],
                               preferred_element_type=jnp.float32)
                       + fb_ref[...]).astype(fo_ref.dtype)


def ffn_fit(x, w1, b1, w2, b2, gamma, beta, fit_w, fit_b):
    """Fused MySupernetFeedForwardNetwork + fit_dense epilogue (eval mode)."""
    M, H = x.shape
    Fh = w1.shape[1]
    F = fit_w.shape[1]
    tm = _row_tile(M)
    nt = pl.cdiv(M, tm)
    tk = _k_tile(Fh)
    kt = pl.cdiv(Fh, tk)
    out, fit = pl.pallas_call(
        _ffn_fit_kernel,
        out_shape=(jax.ShapeDtypeStruct((M, H), jnp.float32),
                   jax.ShapeDtypeStruct((M, F), jnp.float32)),
        grid=(nt, kt),
        in_specs=[pl.BlockSpec((tm, H), lambda i, k: (i, 0)),
                  pl.BlockSpec((H, tk), lambda i, k: (0, k)),
                  pl.BlockSpec((1, tk), lambda i, k: (0, k)),
                  pl.BlockSpec((tk, H), lambda i, k: (k, 0)),
                  _wspec((1, H), lambda i, k: (0, 0)),
                  _wspec((1, H), lambda i, k: (0, 0)),
                  _wspec((1, H), lambda i, k: (0, 0)),
                  _wspec((H, F), lambda i, k: (0, 0)),
                  _wspec((1, F), lambda i, k: (0, 0))],
        out_specs=(pl.BlockSpec((tm, H), lambda i, k: (i, 0)),
                   pl.BlockSpec((tm, F), lambda i, k: (i, 0))),
        scratch_shapes=[pltpu.VMEM((tm, H), jnp.float32)],
        compiler_params=_cp(("parallel", "arbitrary")),
    )(x, w1, b1.reshape(1, Fh), w2, b2.reshape(1, H),
      gamma.reshape(1, H), beta.reshape(1, H), fit_w, fit_b.reshape(1, F))
    return out, fit


# ------------------------------ Model (glue) --------------------------------

def init_params(key, cfg):
    """Deterministic init matching _init_weights: N(0, 0.02) weights, zero bias,
    LayerNorm weight=1 / bias=0. Matmul weights stored in bf16 (MXU operands)."""
    def normal(k, shape, dtype=jnp.bfloat16):
        return (0.02 * jax.random.normal(k, shape, jnp.float32)).astype(dtype)

    keys = iter(jax.random.split(key, 512))
    H = cfg['hidden_size']
    nh = cfg['num_heads']
    D = H // nh
    Fh = cfg['max_ffn_hidden_size']
    fit = cfg['fit_size']
    params = {
        'tok_emb': normal(next(keys), (cfg['vocab_size'], H), jnp.float32),
        'seg_emb': normal(next(keys), (cfg['type_vocab_size'], H), jnp.float32),
        'pos_emb': normal(next(keys), (cfg['max_position'], H), jnp.float32),
        'emb_ln_g': jnp.ones((H,), jnp.float32),
        'emb_ln_b': jnp.zeros((H,), jnp.float32),
        'fit_w': normal(next(keys), (H, fit)),
        'fit_b': jnp.zeros((fit,), jnp.float32),
        'fit_attn_w': [normal(next(keys), (H, fit)),
                       normal(next(keys), (cfg['mobile_inner_hidden'], fit))],
        'fit_attn_b': [jnp.zeros((fit,), jnp.float32),
                       jnp.zeros((fit,), jnp.float32)],
        'layers': [],
    }

    def heads(w):   # (H, H) -> (nh, H, D)   (column h*D+d -> [h, :, d])
        return w.reshape(H, nh, D).transpose(1, 0, 2)

    for _ in range(cfg['num_layers']):
        blocks = []
        for j in range(cfg['type_each_block']):
            wq = normal(next(keys), (H, H))
            wk = normal(next(keys), (H, H))
            wv = normal(next(keys), (H, H))
            blk = {
                # fused per-head Q|K|V weight slabs, bf16, resident in the attn kernel
                'wqkv': jnp.stack([heads(wq), heads(wk), heads(wv)], axis=0),
                'bqkv': jnp.zeros((3, nh, 1, D), jnp.float32),
                'wo': normal(next(keys), (H, H)), 'bo': jnp.zeros((H,), jnp.float32),
                'attn_ln_g': jnp.ones((H,), jnp.float32),
                'attn_ln_b': jnp.zeros((H,), jnp.float32),
                'w1': normal(next(keys), (H, Fh)), 'b1': jnp.zeros((Fh,), jnp.float32),
                'w2': normal(next(keys), (Fh, H)), 'b2': jnp.zeros((H,), jnp.float32),
                'ffn_ln_g': jnp.ones((H,), jnp.float32),
                'ffn_ln_b': jnp.zeros((H,), jnp.float32),
                # DynamicLinear active slice: dense1 out / dense2 in = init*(j+1)
                'ffn_hidden': cfg['init_hidden_size'] * (j + 1),
            }
            blocks.append(blk)
        # TODO(synk): MobileBertTransformerBlockForSupernet blocks (second half of
        # each encoder layer) are not implementable here (class def unavailable);
        # select_arch is restricted to MySupernet blocks.
        params['layers'].append(blocks)
    return params


def mysupernet_block_forward(blk, x, add_mask, num_heads,
                             fit_w, fit_b, fit_attn_w, fit_attn_b):
    """MySupernetTransformerBlock: BERT self-attention + dynamic FFN,
    with fit_dense / fit_dense_attn fused into the kernel epilogues."""
    B, S, H = x.shape
    xf = x.reshape(B * S, H)

    attn_scores, ctx = attention_core(x, add_mask, blk['wqkv'], blk['bqkv'],
                                      num_heads)

    attn_out, fit_attn = proj_ln_fit(ctx.reshape(B * S, H), xf,
                                     blk['wo'], blk['bo'],
                                     blk['attn_ln_g'], blk['attn_ln_b'],
                                     fit_attn_w, fit_attn_b)

    hj = blk['ffn_hidden']  # static python int -> static DynamicLinear slice
    out, fit_ffn = ffn_fit(attn_out,
                           blk['w1'][:, :hj], blk['b1'][:hj],
                           blk['w2'][:hj, :], blk['b2'],
                           blk['ffn_ln_g'], blk['ffn_ln_b'],
                           fit_w, fit_b)
    return (out.reshape(B, S, H), attn_scores,
            fit_attn.reshape(B, S, -1), fit_ffn.reshape(B, S, -1))


def mysupernet_single_forward(params, token_ids, segment_ids, position_ids,
                              attn_mask, select_arch, num_heads, type_blocks):
    """MySupernetSingle.forward (use_fit_dense=True, use_lm=False,
    is_calc_pca_cka=False, get_cka_pair=False, dropout = eval identity)."""
    B, S = token_ids.shape
    emb = (params['tok_emb'][token_ids]
           + params['seg_emb'][segment_ids]
           + params['pos_emb'][position_ids])
    H = emb.shape[-1]
    embf = emb.reshape(B * S, H)
    outf, fit0 = emb_ln_fit(embf, params['emb_ln_g'], params['emb_ln_b'],
                            params['fit_w'], params['fit_b'])
    output = outf.reshape(B, S, H)

    add_mask = ((1.0 - attn_mask.astype(jnp.float32)) * -10000.0)[:, None, :]  # (B,1,S)

    all_attn_outputs, all_attn_scores, all_ffn_outputs = [], [], []
    all_ffn_outputs.append(fit0.reshape(B, S, -1))

    num_layers = len(params['layers'])
    type_each_block = len(params['layers'][0])
    cka_each_layer = [[0.0] * num_layers for _ in range(type_blocks)]
    pca_each_layer = [[0.0] * num_layers for _ in range(type_blocks)]
    # TODO(synk): pca_torch / CKA statistics not computed (is_calc_pca_cka=False path).

    for layer_idx, arch_id in enumerate(select_arch):
        assert arch_id < type_each_block, \
            "MobileBertTransformerBlockForSupernet branch not available"
        blk = params['layers'][layer_idx][arch_id]
        fa = arch_id // type_each_block  # 0 for MySupernet blocks
        output, attn_score, fit_attn, fit_ffn = mysupernet_block_forward(
            blk, output, add_mask, num_heads,
            params['fit_w'], params['fit_b'],
            params['fit_attn_w'][fa], params['fit_attn_b'][fa])
        all_attn_scores.append(attn_score)
        all_ffn_outputs.append(fit_ffn)
        all_attn_outputs.append(fit_attn)

    return (output, all_attn_scores, all_attn_outputs, all_ffn_outputs,
            cka_each_layer, pca_each_layer)


# --------------------------------- main --------------------------------------

if __name__ == "__main__":
    cfg = dict(vocab_size=100, type_vocab_size=2, max_position=32,
               hidden_size=32, num_heads=2, num_layers=2, type_each_block=2,
               max_ffn_hidden_size=64, init_hidden_size=16,
               hidden_size_increment=16, fit_size=32, mobile_inner_hidden=32)

    key = jax.random.PRNGKey(0)
    pkey, dkey = jax.random.split(key)
    params = init_params(pkey, cfg)

    B, S = 2, 8
    token_ids = jax.random.randint(dkey, (B, S), 0, cfg['vocab_size'], dtype=jnp.int32)
    segment_ids = jnp.zeros((B, S), jnp.int32)
    position_ids = jnp.broadcast_to(jnp.arange(S, dtype=jnp.int32), (B, S))
    attn_mask = jnp.ones((B, S), jnp.float32)
    select_arch = [0, 1]  # one MySupernet block variant per layer (j=0, j=1)

    (output, all_attn_scores, all_attn_outputs, all_ffn_outputs,
     cka_each_layer, pca_each_layer) = mysupernet_single_forward(
        params, token_ids, segment_ids, position_ids, attn_mask,
        select_arch, cfg['num_heads'], type_blocks=cfg['type_each_block'] * 2)

    jax.block_until_ready(output)
    for t in all_attn_scores + all_attn_outputs + all_ffn_outputs:
        jax.block_until_ready(t)
    print("KERNEL_OK")
</pallas_src>

<mosaic_0001>
module attributes {stable_mosaic.version = 11 : i64} {
  func.func @k(%arg0: i32, %arg1: memref<8x128xf32, #tpu.memory_space<vmem>>, %arg2: memref<8x128xf32, #tpu.memory_space<vmem>>, %arg3: memref<8x128xf32, #tpu.memory_space<vmem>>) attributes {dimension_semantics = [#tpu.dimension_semantics<arbitrary>], iteration_bounds = array<i64: 2>, scalar_prefetch = 0 : i64, scratch_operands = 0 : i64, tpu.core_type = #tpu.core_type<tc>, window_params = [{pipeline_mode = #tpu.pipeline_mode<synchronous>, transform_indices = @transform_0, window_bounds = array<i64: 8, 128>}, {pipeline_mode = #tpu.pipeline_mode<synchronous>, transform_indices = @transform_1, window_bounds = array<i64: 8, 128>}, {pipeline_mode = #tpu.pipeline_mode<synchronous>, transform_indices = @transform_2, window_bounds = array<i64: 8, 128>}]} {
    %c0 = arith.constant 0 : index
    %c0_0 = arith.constant 0 : index
    %0 = vector.load %arg1[%c0, %c0_0] : memref<8x128xf32, #tpu.memory_space<vmem>>, vector<8x128xf32>
    %c0_1 = arith.constant 0 : index
    %c0_2 = arith.constant 0 : index
    %1 = vector.load %arg2[%c0_1, %c0_2] : memref<8x128xf32, #tpu.memory_space<vmem>>, vector<8x128xf32>
    %2 = arith.addf %0, %1 : vector<8x128xf32>
    %c0_3 = arith.constant 0 : index
    %c0_4 = arith.constant 0 : index
    %3 = vector.load %arg3[%c0_3, %c0_4] : memref<8x128xf32, #tpu.memory_space<vmem>>, vector<8x128xf32>
    tpu.vector_store %arg3[%c0_3, %c0_4], %2 {strides = array<i32>} : memref<8x128xf32, #tpu.memory_space<vmem>>, vector<8x128xf32>,
    return
  }
  func.func @transform_0(%arg0: i32) -> (i32, i32) {
    %c0_i32 = arith.constant 0 : i32
    %c0_i32_0 = arith.constant 0 : i32
    %c0_i32_1 = arith.constant 0 : i32
    return %c0_i32, %c0_i32_0 : i32, i32
  }
  func.func @transform_1(%arg0: i32) -> (i32, i32) {
    %c0_i32 = arith.constant 0 : i32
    %c0_i32_0 = arith.constant 0 : i32
    %c0_i32_1 = arith.constant 0 : i32
    return %c0_i32, %c0_i32_0 : i32, i32
  }
  func.func @transform_2(%arg0: i32) -> (i32, i32) {
    %c0_i32 = arith.constant 0 : i32
    %c0_i32_0 = arith.constant 0 : i32
    %c0_i32_1 = arith.constant 0 : i32
    return %c0_i32, %c0_i32_0 : i32, i32
  }
}

module attributes {stable_mosaic.version = 11 : i64} {
  func.func @_emb_ln_fit_kernel(%arg0: i32, %arg1: memref<16x32xf32, #tpu.memory_space<vmem>>, %arg2: memref<1x32xf32, #tpu.memory_space<vmem>>, %arg3: memref<1x32xf32, #tpu.memory_space<vmem>>, %arg4: memref<32x32xbf16, #tpu.memory_space<vmem>>, %arg5: memref<1x32xf32, #tpu.memory_space<vmem>>, %arg6: memref<16x32xf32, #tpu.memory_space<vmem>>, %arg7: memref<16x32xf32, #tpu.memory_space<vmem>>) attributes {dimension_semantics = [#tpu.dimension_semantics<parallel>], iteration_bounds = array<i64: 1>, scalar_prefetch = 0 : i64, scratch_operands = 0 : i64, tpu.core_type = #tpu.core_type<tc>, window_params = [{transform_indices = @transform_0, window_bounds = array<i64: 16, 32>}, {pipeline_mode = #tpu.pipeline_mode<synchronous>, transform_indices = @transform_1, window_bounds = array<i64: 1, 32>}, {pipeline_mode = #tpu.pipeline_mode<synchronous>, transform_indices = @transform_2, window_bounds = array<i64: 1, 32>}, {pipeline_mode = #tpu.pipeline_mode<synchronous>, transform_indices = @transform_3, window_bounds = array<i64: 32, 32>}, {pipeline_mode = #tpu.pipeline_mode<synchronous>, transform_indices = @transform_4, window_bounds = array<i64: 1, 32>}, {transform_indices = @transform_5, window_bounds = array<i64: 16, 32>}, {transform_indices = @transform_6, window_bounds = array<i64: 16, 32>}]} {
    %c0 = arith.constant 0 : index
    %c0_0 = arith.constant 0 : index
    %0 = vector.load %arg1[%c0, %c0_0] : memref<16x32xf32, #tpu.memory_space<vmem>>, vector<16x32xf32>
    %c0_1 = arith.constant 0 : index
    %c0_2 = arith.constant 0 : index
    %1 = vector.load %arg2[%c0_1, %c0_2] : memref<1x32xf32, #tpu.memory_space<vmem>>, vector<1x32xf32>
    %c0_3 = arith.constant 0 : index
    %c0_4 = arith.constant 0 : index
    %2 = vector.load %arg3[%c0_3, %c0_4] : memref<1x32xf32, #tpu.memory_space<vmem>>, vector<1x32xf32>
    %cst = arith.constant dense<0.000000e+00> : vector<16xf32>
    %3 = vector.multi_reduction <add>, %0, %cst [1] : vector<16x32xf32> to vector<16xf32>
    %4 = vector.shape_cast %3 : vector<16xf32> to vector<16x1xf32>
    %cst_5 = arith.constant 3.200000e+01 : f32
    %5 = vector.broadcast %cst_5 : f32 to vector<16x1xf32>
    %6 = arith.divf %4, %5 : vector<16x1xf32>
    %7 = vector.broadcast %6 : vector<16x1xf32> to vector<16x32xf32>
    %8 = arith.subf %0, %7 : vector<16x32xf32>
    %9 = arith.mulf %8, %8 : vector<16x32xf32>
    %cst_6 = arith.constant dense<0.000000e+00> : vector<16xf32>
    %10 = vector.multi_reduction <add>, %9, %cst_6 [1] : vector<16x32xf32> to vector<16xf32>
    %11 = vector.shape_cast %10 : vector<16xf32> to vector<16x1xf32>
    %cst_7 = arith.constant 3.200000e+01 : f32
    %12 = vector.broadcast %cst_7 : f32 to vector<16x1xf32>
    %13 = arith.divf %11, %12 : vector<16x1xf32>
    %14 = vector.broadcast %6 : vector<16x1xf32> to vector<16x32xf32>
    %15 = arith.subf %0, %14 : vector<16x32xf32>
    %cst_8 = arith.constant 9.99999974E-6 : f32
    %16 = vector.broadcast %cst_8 : f32 to vector<16x1xf32>
    %17 = arith.addf %13, %16 : vector<16x1xf32>
    %18 = math.rsqrt %17 : vector<16x1xf32>
    %19 = vector.broadcast %18 : vector<16x1xf32> to vector<16x32xf32>
    %20 = arith.mulf %15, %19 : vector<16x32xf32>
    %21 = vector.broadcast %1 : vector<1x32xf32> to vector<16x32xf32>
    %22 = arith.mulf %20, %21 : vector<16x32xf32>
    %23 = vector.broadcast %2 : vector<1x32xf32> to vector<16x32xf32>
    %24 = arith.addf %22, %23 : vector<16x32xf32>
    %c0_9 = arith.constant 0 : index
    %c0_10 = arith.constant 0 : index
    %25 = vector.load %arg6[%c0_9, %c0_10] : memref<16x32xf32, #tpu.memory_space<vmem>>, vector<16x32xf32>
    tpu.vector_store %arg6[%c0_9, %c0_10], %24 {strides = array<i32>} : memref<16x32xf32, #tpu.memory_space<vmem>>, vector<16x32xf32>,
    %26 = arith.truncf %24 : vector<16x32xf32> to vector<16x32xbf16>
    %c0_11 = arith.constant 0 : index
    %c0_12 = arith.constant 0 : index
    %27 = vector.load %arg4[%c0_11, %c0_12] : memref<32x32xbf16, #tpu.memory_space<vmem>>, vector<32x32xbf16>
    %cst_13 = arith.constant dense<0.000000e+00> : vector<16x32xf32>
    %28 = tpu.matmul %26, %27, %cst_13 {dimension_numbers = #tpu.dot_dimension_numbers<[1], [0], [0], [1], [0, 0, 1, 1], [], []>} : vector<16x32xbf16>, vector<32x32xbf16>, vector<16x32xf32> -> vector<16x32xf32>
    %c0_14 = arith.constant 0 : index
    %c0_15 = arith.constant 0 : index
    %29 = vector.load %arg5[%c0_14, %c0_15] : memref<1x32xf32, #tpu.memory_space<vmem>>, vector<1x32xf32>
    %30 = vector.broadcast %29 : vector<1x32xf32> to vector<16x32xf32>
    %31 = arith.addf %28, %30 : vector<16x32xf32>
    %c0_16 = arith.constant 0 : index
    %c0_17 = arith.constant 0 : index
    %32 = vector.load %arg7[%c0_16, %c0_17] : memref<16x32xf32, #tpu.memory_space<vmem>>, vector<16x32xf32>
    tpu.vector_store %arg7[%c0_16, %c0_17], %31 {strides = array<i32>} : memref<16x32xf32, #tpu.memory_space<vmem>>, vector<16x32xf32>,
    return
  }
  func.func @transform_0(%arg0: i32) -> (i32, i32) {
    %c0_i32 = arith.constant 0 : i32
    %c0_i32_0 = arith.constant 0 : i32
    return %arg0, %c0_i32 : i32, i32
  }
  func.func @transform_1(%arg0: i32) -> (i32, i32) {
    %c0_i32 = arith.constant 0 : i32
    %c0_i32_0 = arith.constant 0 : i32
    %c0_i32_1 = arith.constant 0 : i32
    return %c0_i32, %c0_i32_0 : i32, i32
  }
  func.func @transform_2(%arg0: i32) -> (i32, i32) {
    %c0_i32 = arith.constant 0 : i32
    %c0_i32_0 = arith.constant 0 : i32
    %c0_i32_1 = arith.constant 0 : i32
    return %c0_i32, %c0_i32_0 : i32, i32
  }
  func.func @transform_3(%arg0: i32) -> (i32, i32) {
    %c0_i32 = arith.constant 0 : i32
    %c0_i32_0 = arith.constant 0 : i32
    %c0_i32_1 = arith.constant 0 : i32
    return %c0_i32, %c0_i32_0 : i32, i32
  }
  func.func @transform_4(%arg0: i32) -> (i32, i32) {
    %c0_i32 = arith.constant 0 : i32
    %c0_i32_0 = arith.constant 0 : i32
    %c0_i32_1 = arith.constant 0 : i32
    return %c0_i32, %c0_i32_0 : i32, i32
  }
  func.func @transform_5(%arg0: i32) -> (i32, i32) {
    %c0_i32 = arith.constant 0 : i32
    %c0_i32_0 = arith.constant 0 : i32
    return %arg0, %c0_i32 : i32, i32
  }
  func.func @transform_6(%arg0: i32) -> (i32, i32) {
    %c0_i32 = arith.constant 0 : i32
    %c0_i32_0 = arith.constant 0 : i32
    return %arg0, %c0_i32 : i32, i32
  }
}

</mosaic_0001>

<llo_original>
// kernel: tpu_custom_call.1
$region0: #{tpu_custom_call.1}
  #allocation0 [shape = 'u32[]', space=smem, size = 0x4, offset = 0x4, fixed_abs, tag = 'smem constant byte address 0x4 - core index']
  #allocation1 [shape = 'u32[72,128]{1,0:T(1,128)}', space=vmem, size = 0x9000, scoped, tag = 'internal scratch']
  %s0 = inlined_call_operand.hbm [shape: f32[8,128], index: 0, kind: input, shape index: {}]
  %s1 = inlined_call_operand.hbm [shape: f32[8,128], index: 1, kind: input, shape index: {}]
  %s2 = inlined_call_operand.hbm [shape: f32[8,128], index: 2, kind: output, shape index: {}]
  %s3 = sld [smem:[#allocation0]]
  $region49: #{tpu_custom_call.1} parent=0
    _
  %s5 = ssub.s32 1, %s3
  %s6 = scalar_select 0, %s5, %s3
  $region1: #{tpu_custom_call.1} parent=0
    #allocation2 [shape = 'u8[4096]{0}', space=vmem, size = 0x1000, scoped, tag = 'input window, operand 0, single buffered']
    #allocation3 [shape = 's32[2]{0}', space=sflag, size = 0x8, scoped, tag = 'scoped memory for tpu_custom_call.1']
    #allocation4 [shape = 's32[2]{0}', space=sflag, size = 0x8, scoped, tag = 'scoped memory for tpu_custom_call.1']
    #allocation5 [shape = 'u8[4096]{0}', space=vmem, size = 0x1000, scoped, tag = 'input window, operand 1, single buffered']
    #allocation6 [shape = 's32[1]{0}', space=sflag, size = 0x4, scoped, tag = 'scoped memory for tpu_custom_call.1']
    #allocation7 [shape = 'u8[4096]{0}', space=vmem, size = 0x1000, scoped, tag = 'output window, operand 0, single buffered']
    %7 = vsyncpa [#allocation3], 0
    %8 = vsyncpa [#allocation6], 0
    %9 = vsyncpa [#allocation4], 0
    loop: start=0, step=1, limit=4
    $region2: #{tpu_custom_call.1} parent=1 // loop_pre_header
      _
    $region3: #{tpu_custom_call.1} parent=1 // loop_header
      %s11 = sphi 0, %s15
      %p12 = scmp.ge.s32.totalorder %s11, 4
      %s19 = sphi 0, %s19
      %s21 = sphi 0, %s19
      %s22 = sphi 0, %s21
      %s36 = sphi 0, %s22
      %s40 = sphi 0, %s40
      %s42 = sphi 0, %s40
      %s43 = sphi 0, %s42
      %s57 = sphi 0, %s43
      %s61 = sphi 0, %s61
      %s63 = sphi 0, %s61
      %s64 = sphi 0, %s63
      %s78 = sphi 0, %s64
    $region4: #{tpu_custom_call.1} parent=1 // loop_header_branch
      %14 = sbr.rel (%p12) target = $region8
    $region5: #{tpu_custom_call.1} parent=1 // loop_body
      %s16 = ssub.s32 %s11, 1
      %s17 = ssub.s32 %s11, 2
      %s18 = sadd.s32 %s11, 1
      %s20 = sadd.s32 %s19, 1
      %p23 = scmp.eq.s32.totalorder %s11, 1
      %p24 = scmp.ne.s32.totalorder %s19, %s21
      %p25 = scmp.eq.s32.totalorder %s11, 0
      %p26 = por %p24, %p25
      %p27 = scmp.ne.s32.totalorder %s19, %s21
      %p28 = scmp.eq.s32.totalorder %s16, 1
      %p29 = por %p27, %p28
      %p30 = scmp.ne.s32.totalorder %s21, %s22
      %p31 = scmp.eq.s32.totalorder %s16, 0
      %p32 = por %p30, %p31
      %p33 = scmp.ne.s32.totalorder %s21, %s22
      %p34 = scmp.eq.s32.totalorder %s17, 1
      %p35 = por %p33, %p34
      %p37 = scmp.ne.s32.totalorder %s22, %s36
      %p38 = scmp.eq.s32.totalorder %s17, 0
      %p39 = por %p37, %p38
      %s41 = sadd.s32 %s40, 1
      %p44 = scmp.eq.s32.totalorder %s11, 1
      %p45 = scmp.ne.s32.totalorder %s40, %s42
      %p46 = scmp.eq.s32.totalorder %s11, 0
      %p47 = por %p45, %p46
      %p48 = scmp.ne.s32.totalorder %s40, %s42
      %p49 = scmp.eq.s32.totalorder %s16, 1
      %p50 = por %p48, %p49
      %p51 = scmp.ne.s32.totalorder %s42, %s43
      %p52 = scmp.eq.s32.totalorder %s16, 0
      %p53 = por %p51, %p52
      %p54 = scmp.ne.s32.totalorder %s42, %s43
      %p55 = scmp.eq.s32.totalorder %s17, 1
      %p56 = por %p54, %p55
      %p58 = scmp.ne.s32.totalorder %s43, %s57
      %p59 = scmp.eq.s32.totalorder %s17, 0
      %p60 = por %p58, %p59
      %s62 = sadd.s32 %s61, 1
      %p65 = scmp.eq.s32.totalorder %s11, 1
      %p66 = scmp.ne.s32.totalorder %s61, %s63
      %p67 = scmp.eq.s32.totalorder %s11, 0
      %p68 = por %p66, %p67
      %p69 = scmp.ne.s32.totalorder %s61, %s63
      %p70 = scmp.eq.s32.totalorder %s16, 1
      %p71 = por %p69, %p70
      %p72 = scmp.ne.s32.totalorder %s63, %s64
      %p73 = scmp.eq.s32.totalorder %s16, 0
      %p74 = por %p72, %p73
      %p75 = scmp.ne.s32.totalorder %s63, %s64
      %p76 = scmp.eq.s32.totalorder %s17, 1
      %p77 = por %p75, %p76
      %p79 = scmp.ne.s32.totalorder %s64, %s78
      %p80 = scmp.eq.s32.totalorder %s17, 0
      %p81 = por %p79, %p80
      %p82 = scmp.le.s32.totalorder 1, %s11
      %p83 = scmp.lt.s32.totalorder %s11, 3
      %p84 = pnand %p82, %p83
      %p85 = pneg %p84
      // Predicated region
      $region9: #{tpu_custom_call.1} parent=5 // pred_check
        _
      $region10: #{tpu_custom_call.1} parent=5 // pred_check_branch
        %87 = sbr.rel (%p84) target = $region12
      $region11: #{tpu_custom_call.1} parent=5 // pred_region
        %s88 = ssub.s32 %s11, 1
        // Predicated region
        $region13: #{tpu_custom_call.1} parent=11 // pred_check
          %p89 = pneg %p32
        $region14: #{tpu_custom_call.1} parent=11 // pred_check_branch
          %91 = sbr.rel (%p89) target = $region16
        $region15: #{tpu_custom_call.1} parent=11 // pred_region
          %93 = vsyncadd [#allocation3], 0
          %s95 = sshll.u32 %s0, 4
          %s96 = int_to_ptr.hbm [resolvable:$true] %s95
          %s97 = sshll.u32 [#allocation2], 4
          %s98 = int_to_ptr.vmem [resolvable:$true] %s97
          %100 = dma.hbm_to_vmem [thread:$0]  %s96, 128, %s98, [#allocation3]
        $region16: #{tpu_custom_call.1} parent=11 // pred_fallthru
          _
        // Predicated region
        $region17: #{tpu_custom_call.1} parent=11 // pred_check
          %p101 = pneg %p53
        $region18: #{tpu_custom_call.1} parent=11 // pred_check_branch
          %103 = sbr.rel (%p101) target = $region20
        $region19: #{tpu_custom_call.1} parent=11 // pred_region
          %105 = vsyncadd [#allocation6], 0
          %s107 = sshll.u32 %s1, 4
          %s108 = int_to_ptr.hbm [resolvable:$true] %s107
          %s109 = sshll.u32 [#allocation5], 4
          %s110 = int_to_ptr.vmem [resolvable:$true] %s109
          %112 = dma.hbm_to_vmem [thread:$0]  %s108, 128, %s110, [#allocation6]
        $region20: #{tpu_custom_call.1} parent=11 // pred_fallthru
          _
      $region12: #{tpu_custom_call.1} parent=5 // pred_fallthru
        _
      %p113 = scmp.lt.s32.totalorder %s11, 2
      // Predicated region
      $region21: #{tpu_custom_call.1} parent=5 // pred_check
        %p114 = pneg %p113
      $region22: #{tpu_custom_call.1} parent=5 // pred_check_branch
        %116 = sbr.rel (%p114) target = $region24
      $region23: #{tpu_custom_call.1} parent=5 // pred_region
        _
      $region24: #{tpu_custom_call.1} parent=5 // pred_fallthru
        _
      %p117 = scmp.le.s32.totalorder 1, %s11
      %p118 = scmp.lt.s32.totalorder %s11, 3
      %p119 = pnand %p117, %p118
      %p120 = pneg %p119
      // Predicated region
      $region25: #{tpu_custom_call.1} parent=5 // pred_check
        _
      $region26: #{tpu_custom_call.1} parent=5 // pred_check_branch
        %122 = sbr.rel (%p119) target = $region28
      $region27: #{tpu_custom_call.1} parent=5 // pred_region
        %s123 = ssub.s32 %s11, 1
        // Predicated region
        $region29: #{tpu_custom_call.1} parent=27 // pred_check
          %p124 = pneg %p32
        $region30: #{tpu_custom_call.1} parent=27 // pred_check_branch
          %126 = sbr.rel (%p124) target = $region32
        $region31: #{tpu_custom_call.1} parent=27 // pred_region
          %128 = dma.done [#allocation3], 128
        $region32: #{tpu_custom_call.1} parent=27 // pred_fallthru
          _
        // Predicated region
        $region33: #{tpu_custom_call.1} parent=27 // pred_check
          %p129 = pneg %p53
        $region34: #{tpu_custom_call.1} parent=27 // pred_check_branch
          %131 = sbr.rel (%p129) target = $region36
        $region35: #{tpu_custom_call.1} parent=27 // pred_region
          %133 = dma.done [#allocation6], 128
        $region36: #{tpu_custom_call.1} parent=27 // pred_fallthru
          _
        %p134 = pneg %p32
        %p135 = pneg %p29
        %p136 = pneg %p53
        %p137 = pneg %p50
        %p138 = pneg %p74
        %p139 = pneg %p71
        %v140 = vld [vmem:[#allocation2] sm:$0xff]
        %v141 = vld [vmem:[#allocation5] sm:$0xff]
        %v142 = vadd.f32 %v140, %v141
        %143 = vst [vmem:[#allocation7] sm:$0xff] %v142
        // Predicated region
        $region37: #{tpu_custom_call.1} parent=27 // pred_check
          %p144 = pneg %p71
        $region38: #{tpu_custom_call.1} parent=27 // pred_check_branch
          %146 = sbr.rel (%p144) target = $region40
        $region39: #{tpu_custom_call.1} parent=27 // pred_region
          %148 = vsyncadd [#allocation4], 0
          %s150 = sshll.u32 [#allocation7], 4
          %s151 = int_to_ptr.vmem [resolvable:$true] %s150
          %s152 = sshll.u32 %s2, 4
          %s153 = int_to_ptr.hbm [resolvable:$true] %s152
          %155 = dma.vmem_to_hbm [thread:$0]  %s151, 128, %s153, [#allocation4]
        $region40: #{tpu_custom_call.1} parent=27 // pred_fallthru
          _
        // Predicated region
        $region41: #{tpu_custom_call.1} parent=27 // pred_check
          %p156 = pneg %p71
        $region42: #{tpu_custom_call.1} parent=27 // pred_check_branch
          %158 = sbr.rel (%p156) target = $region44
        $region43: #{tpu_custom_call.1} parent=27 // pred_region
          %160 = dma.done [#allocation4], 128
        $region44: #{tpu_custom_call.1} parent=27 // pred_fallthru
          _
      $region28: #{tpu_custom_call.1} parent=5 // pred_fallthru
        _
      %p161 = scmp.le.s32.totalorder 2, %s11
      // Predicated region
      $region45: #{tpu_custom_call.1} parent=5 // pred_check
        %p162 = pneg %p161
      $region46: #{tpu_custom_call.1} parent=5 // pred_check_branch
        %164 = sbr.rel (%p162) target = $region48
      $region47: #{tpu_custom_call.1} parent=5 // pred_region
        %s165 = ssub.s32 %s11, 2
      $region48: #{tpu_custom_call.1} parent=5 // pred_fallthru
        _
    $region6: #{tpu_custom_call.1} parent=1 // loop_footer
      %s15 = sadd.s32 1, %s11
    $region7: #{tpu_custom_call.1} parent=1 // loop_footer_branch
      %10 = sbr.rel target = $region3
    $region8: #{tpu_custom_call.1} parent=1 // loop_exit
      _
    %166 = vsyncpa [#allocation3], 1
    %s167 = scalar_lea.sflag [#allocation3], 1
    %168 = vsyncpa %s167, 1
    %169 = vsyncpa [#allocation6], 1
    %170 = vsyncpa [#allocation4], 1
    %s171 = scalar_lea.sflag [#allocation4], 1
    %172 = vsyncpa %s171, 1

// kernel: tpu_custom_call.1
$region0: #{tpu_custom_call.1}
  #allocation0 [shape = 'u32[]', space=smem, size = 0x4, offset = 0x4, fixed_abs, tag = 'smem constant byte address 0x4 - core index']
  #allocation1 [shape = 'u32[72,128]{1,0:T(1,128)}', space=vmem, size = 0x9000, scoped, tag = 'internal scratch']
  %s0 = inlined_call_operand.hbm [shape: f32[16,32], index: 0, kind: input, shape index: {}]
  %s1 = inlined_call_operand.hbm [shape: f32[1,32], index: 1, kind: input, shape index: {}]
  %s2 = inlined_call_operand.vmem [shape: f32[1,32], index: 2, kind: input, shape index: {}]
  %s3 = inlined_call_operand.hbm [shape: bf16[32,32], index: 3, kind: input, shape index: {}]
  %s4 = inlined_call_operand.vmem [shape: f32[1,32], index: 4, kind: input, shape index: {}]
  %s5 = inlined_call_operand.hbm [shape: f32[16,32], index: 5, kind: output, shape index: {0}]
  %s6 = inlined_call_operand.hbm [shape: f32[16,32], index: 6, kind: output, shape index: {1}]
  %7 = xla_tuple %s5, %s6
  %s8 = sld [smem:[#allocation0]]
  $region50: #{tpu_custom_call.1} parent=0
    _
  %s10 = ssub.s32 1, %s8
  %s11 = scalar_select 0, %s10, %s8
  $region1: #{tpu_custom_call.1} parent=0
    #allocation2 [shape = 'u8[8192]{0}', space=vmem, size = 0x2000, scoped, tag = 'input window, operand 0, single buffered']
    #allocation3 [shape = 's32[1]{0}', space=sflag, size = 0x4, scoped, tag = 'scoped memory for tpu_custom_call.1']
    #allocation4 [shape = 's32[1]{0}', space=sflag, size = 0x4, scoped, tag = 'scoped memory for tpu_custom_call.1']
    #allocation5 [shape = 'u8[512]{0}', space=vmem, size = 0x400, scoped, tag = 'input window, operand 1, single buffered']
    #allocation6 [shape = 's32[1]{0}', space=sflag, size = 0x4, scoped, tag = 'scoped memory for tpu_custom_call.1']
    #allocation7 [shape = 'u8[8192]{0}', space=vmem, size = 0x2000, scoped, tag = 'input window, operand 3, single buffered']
    #allocation8 [shape = 'u8[8192]{0}', space=vmem, size = 0x2000, scoped, tag = 'output window, operand 0, single buffered']
    #allocation9 [shape = 'u8[8192]{0}', space=vmem, size = 0x2000, scoped, tag = 'output window, operand 1, single buffered']
    #allocation10 [shape = 's32[1]{0}', space=sflag, size = 0x4, scoped, tag = 'scoped memory for tpu_custom_call.1']
    %12 = vsyncpa [#allocation3], 0
    %13 = vsyncpa [#allocation6], 0
    %14 = vsyncpa [#allocation4], 0
    %15 = vsyncpa [#allocation10], 0
    // Predicated region
    $region2: #{tpu_custom_call.1} parent=1 // pred_check
      _
    $region3: #{tpu_custom_call.1} parent=1 // pred_check_branch
      %17 = sbr.rel (0) target = $region5
    $region4: #{tpu_custom_call.1} parent=1 // pred_region
      %19 = vsyncadd [#allocation3], 0
      %s20 = sshll.u32 %s0, 4
      %s21 = int_to_ptr.hbm [resolvable:$true] %s20
      %s22 = sshll.u32 [#allocation2], 4
      %s23 = int_to_ptr.vmem [resolvable:$true] %s22
      %28 = dma.hbm_to_vmem [thread:$0]  %s21, 256, %s23, [#allocation3], 128, 128, 8
    $region5: #{tpu_custom_call.1} parent=1 // pred_fallthru
      _
    // Predicated region
    $region6: #{tpu_custom_call.1} parent=1 // pred_check
      _
    $region7: #{tpu_custom_call.1} parent=1 // pred_check_branch
      %30 = sbr.rel (0) target = $region9
    $region8: #{tpu_custom_call.1} parent=1 // pred_region
      %32 = vsyncadd [#allocation6], 0
      %s34 = sshll.u32 %s1, 4
      %s35 = int_to_ptr.hbm [resolvable:$true] %s34
      %s36 = sshll.u32 [#allocation5], 4
      %s37 = int_to_ptr.vmem [resolvable:$true] %s36
      %39 = dma.hbm_to_vmem [thread:$0]  %s35, 16, %s37, [#allocation6]
    $region9: #{tpu_custom_call.1} parent=1 // pred_fallthru
      _
    // Predicated region
    $region10: #{tpu_custom_call.1} parent=1 // pred_check
      _
    $region11: #{tpu_custom_call.1} parent=1 // pred_check_branch
      %41 = sbr.rel (0) target = $region13
    $region12: #{tpu_custom_call.1} parent=1 // pred_region
      _
    $region13: #{tpu_custom_call.1} parent=1 // pred_fallthru
      _
    // Predicated region
    $region14: #{tpu_custom_call.1} parent=1 // pred_check
      _
    $region15: #{tpu_custom_call.1} parent=1 // pred_check_branch
      %43 = sbr.rel (0) target = $region17
    $region16: #{tpu_custom_call.1} parent=1 // pred_region
      %45 = vsyncadd [#allocation6], 0
      %s46 = sshll.u32 %s3, 4
      %s47 = int_to_ptr.hbm [resolvable:$true] %s46
      %s48 = sshll.u32 [#allocation7], 4
      %s49 = int_to_ptr.vmem [resolvable:$true] %s48
      %54 = dma.hbm_to_vmem [thread:$0]  %s47, 256, %s49, [#allocation6], 64, 64, 4
    $region17: #{tpu_custom_call.1} parent=1 // pred_fallthru
      _
    // Predicated region
    $region18: #{tpu_custom_call.1} parent=1 // pred_check
      _
    $region19: #{tpu_custom_call.1} parent=1 // pred_check_branch
      %56 = sbr.rel (0) target = $region21
    $region20: #{tpu_custom_call.1} parent=1 // pred_region
      _
    $region21: #{tpu_custom_call.1} parent=1 // pred_fallthru
      _
    // Predicated region
    $region22: #{tpu_custom_call.1} parent=1 // pred_check
      _
    $region23: #{tpu_custom_call.1} parent=1 // pred_check_branch
      %58 = sbr.rel (0) target = $region25
    $region24: #{tpu_custom_call.1} parent=1 // pred_region
      %60 = dma.done [#allocation3], 256
    $region25: #{tpu_custom_call.1} parent=1 // pred_fallthru
      _
    // Predicated region
    $region26: #{tpu_custom_call.1} parent=1 // pred_check
      _
    $region27: #{tpu_custom_call.1} parent=1 // pred_check_branch
      %62 = sbr.rel (0) target = $region29
    $region28: #{tpu_custom_call.1} parent=1 // pred_region
      %64 = dma.done [#allocation6], 16
    $region29: #{tpu_custom_call.1} parent=1 // pred_fallthru
      _
    // Predicated region
    $region30: #{tpu_custom_call.1} parent=1 // pred_check
      _
    $region31: #{tpu_custom_call.1} parent=1 // pred_check_branch
      %66 = sbr.rel (0) target = $region33
    $region32: #{tpu_custom_call.1} parent=1 // pred_region
      %68 = dma.done [#allocation6], 256
    $region33: #{tpu_custom_call.1} parent=1 // pred_fallthru
      _
    %v70 = vld [vmem:[#allocation2] sm:$0xff]
    %v71 = vld [vmem:[#allocation2 + $0x8] sm:$0xff]
    %v72 = vld [vmem:[#allocation5] sm:$0x1]
    %v73 = vld [vmem:[%s2] sm:$0x1]
    %vm74 = vcmask 261120
    %v75 = vsel %vm74, %v70, 0.0
    %76 = vadd.xlane.f32.xlu0 %v75
    %v77 = vpop.xlane.xlu0 %76
    %v78 = vsel %vm74, %v71, 0.0
    %79 = vadd.xlane.f32.xlu0 %v78
    %v80 = vpop.xlane.xlu0 %79
    %v81 = vrcp.pop 32.0
    %v82 = vmul.f32 32.0, %v81
    %v83 = vsub.f32 1.0, %v82
    %v84 = vmul.f32 %v81, %v83
    %v85 = vadd.f32 %v81, %v84
    %vm86 = vweird.f32 %v81
    %v87 = vsel %vm86, %v81, %v85
    %v88 = vmul.f32 %v77, %v87
    %v89 = vmul.f32 %v80, %v87
    %v90 = vsub.f32 %v70, %v88
    %v91 = vsub.f32 %v71, %v89
    %v92 = vmul.f32 %v90, %v90
    %v93 = vmul.f32 %v91, %v91
    %v94 = vsel %vm74, %v92, 0.0
    %95 = vadd.xlane.f32.xlu0 %v94
    %v96 = vpop.xlane.xlu0 %95
    %v97 = vsel %vm74, %v93, 0.0
    %98 = vadd.xlane.f32.xlu0 %v97
    %v99 = vpop.xlane.xlu0 %98
    %v100 = vmul.f32 %v96, %v87
    %v101 = vmul.f32 %v99, %v87
    %v102 = vadd.f32 %v100, 1e-05
    %v103 = vadd.f32 %v101, 1e-05
    %v104 = vrsqrt.pop %v102
    %v105 = vmul.f32 %v104, %v102
    %v106 = vmul.f32 %v105, %v104
    %v107 = vmul.f32 0.5, %v106
    %v108 = vsub.f32 1.5, %v107
    %v109 = vmul.f32 %v104, %v108
    %vm110 = vweird.f32 %v102
    %vm111 = vweird.f32 %v104
    %vm112 = vmor %vm110, %vm111
    %v113 = vsel %vm112, %v104, %v109
    %v114 = vrsqrt.pop %v103
    %v115 = vmul.f32 %v114, %v103
    %v116 = vmul.f32 %v115, %v114
    %v117 = vmul.f32 0.5, %v116
    %v118 = vsub.f32 1.5, %v117
    %v119 = vmul.f32 %v114, %v118
    %vm120 = vweird.f32 %v103
    %vm121 = vweird.f32 %v114
    %vm122 = vmor %vm120, %vm121
    %v123 = vsel %vm122, %v114, %v119
    %v124 = vmul.f32 %v90, %v113
    %v125 = vmul.f32 %v91, %v123
    %v127 = vperm.slane %v72, 0
    %v129 = vmul.f32 %v124, %v127
    %v130 = vmul.f32 %v125, %v127
    %v132 = vperm.slane %v73, 0
    %v134 = vadd.f32 %v129, %v132
    %v135 = vadd.f32 %v130, %v132
    %136 = vst.msk [vmem:[#allocation8] sm:$0xff] %vm74, %v134
    %137 = vst.msk [vmem:[#allocation8 + $0x8] sm:$0xff] %vm74, %v135
    %v138 = vpack.c.bf16 %v135, %v134
    %v139 = vld [vmem:[#allocation7] sm:$0xf]
    %v140 = vld [vmem:[#allocation7 + $0x4] sm:$0xf]
    %v141 = vld [vmem:[#allocation7 + $0x8] sm:$0xf]
    %v142 = vld [vmem:[#allocation7 + $0xc] sm:$0xf]
    %v143 = vld [vmem:[%s4] sm:$0x1]
    %v145 = vperm.slane %v143, 0
    %v151 = vunpack.c.l.b16 %v139
    %v152 = vunpack.c.l.b16 %v140
    %v153 = vunpack.c.l.b16 %v141
    %v154 = vunpack.c.l.b16 %v142
    %v155 = vpack.c.b16 %v152, %v151
    %v156 = vpack.c.b16 %v154, %v153
    %v160 = vsel %vm74, %v138, 0
    %162 = vmatpush.bf16.msra.mxu0 0
    %163 = vmatpush.bf16.msra.mxu0 0
    %164 = vmatpush.bf16.msra.mxu0 0
    %165 = vmatpush.bf16.msra.mxu0 0
    %166 = vmatpush.bf16.msra.mxu0 0
    %167 = vmatpush.bf16.msra.mxu0 0
    %168 = vmatpush.bf16.msra.mxu0 %v156
    %169 = vmatpush.bf16.msra.mxu0 %v155
    %170 = vmatmul.bf16.gmra.mxu0 %v160
    %v171 = vpop.f32.mrf.mxu0
    %v172 = vadd.f32 %v145, %v171
    %v173 = vpop.f32.mrf.mxu0
    %v174 = vadd.f32 %v145, %v173
    %175 = vdwg.mxu0
    %176 = vst.msk [vmem:[#allocation9] sm:$0xff] %vm74, %v172
    %177 = vst.msk [vmem:[#allocation9 + $0x8] sm:$0xff] %vm74, %v174
    // Predicated region
    $region34: #{tpu_custom_call.1} parent=1 // pred_check
      _
    $region35: #{tpu_custom_call.1} parent=1 // pred_check_branch
      %179 = sbr.rel (0) target = $region37
    $region36: #{tpu_custom_call.1} parent=1 // pred_region
      %181 = vsyncadd [#allocation4], 0
      %s182 = sshll.u32 [#allocation8], 4
      %s183 = int_to_ptr.vmem [resolvable:$true] %s182
      %s184 = sshll.u32 %s5, 4
      %s185 = int_to_ptr.hbm [resolvable:$true] %s184
      %190 = dma.vmem_to_hbm [thread:$0]  %s183, 256, %s185, [#allocation4], 128, 128, 8
    $region37: #{tpu_custom_call.1} parent=1 // pred_fallthru
      _
    // Predicated region
    $region38: #{tpu_custom_call.1} parent=1 // pred_check
      _
    $region39: #{tpu_custom_call.1} parent=1 // pred_check_branch
      %192 = sbr.rel (0) target = $region41
    $region40: #{tpu_custom_call.1} parent=1 // pred_region
      %194 = vsyncadd [#allocation10], 0
      %s195 = sshll.u32 [#allocation9], 4
      %s196 = int_to_ptr.vmem [resolvable:$true] %s195
      %s197 = sshll.u32 %s6, 4
      %s198 = int_to_ptr.hbm [resolvable:$true] %s197
      %203 = dma.vmem_to_hbm [thread:$0]  %s196, 256, %s198, [#allocation10], 128, 128, 8
    $region41: #{tpu_custom_call.1} parent=1 // pred_fallthru
      _
    // Predicated region
    $region42: #{tpu_custom_call.1} parent=1 // pred_check
      _
    $region43: #{tpu_custom_call.1} parent=1 // pred_check_branch
      %205 = sbr.rel (0) target = $region45
    $region44: #{tpu_custom_call.1} parent=1 // pred_region
      %207 = dma.done [#allocation4], 256
    $region45: #{tpu_custom_call.1} parent=1 // pred_fallthru
      _
    // Predicated region
    $region46: #{tpu_custom_call.1} parent=1 // pred_check
      _
    $region47: #{tpu_custom_call.1} parent=1 // pred_check_branch
      %209 = sbr.rel (0) target = $region49
    $region48: #{tpu_custom_call.1} parent=1 // pred_region
      %211 = dma.done [#allocation10], 256
    $region49: #{tpu_custom_call.1} parent=1 // pred_fallthru
      _
    %212 = vsyncpa [#allocation3], 1
    %213 = vsyncpa [#allocation6], 1
    %214 = vsyncpa [#allocation4], 1
    %215 = vsyncpa [#allocation10], 1

</llo_original>
